<compile_context>
chip_gen: v5e
topology: v5e:2x2
jax: 0.10.0
libtpu: 0.0.40
codegen_flags: <defaults>
</compile_context>

<pallas_src>
import jax
import jax.numpy as jnp
import numpy as np
from jax.experimental import pallas as pl
from jax.experimental.pallas import tpu as pltpu


_LANE = 128      # lane width
_BATCH_TILE = 16  # bf16-friendly sublane multiple for the (small) batch dim
_TK_MAX = 512    # max K (input_dim) tile
_TN_MAX = 512    # max N (fused output) tile


def _round_up(x: int, m: int) -> int:
    return ((x + m - 1) // m) * m


def _pad_and_tile(d: int, tmax: int):
    """Padded extent (multiple of the tile) and tile size for one matmul dim."""
    dp = _round_up(max(d, _LANE), _LANE)
    if dp <= tmax:
        return dp, dp            # single tile spans the whole dim
    dp = _round_up(d, tmax)
    return dp, tmax


# ---------------------------------------------------------------------------
# Kernel: tiled fused linear  o = x @ W + b  (bf16 MXU, f32 accumulator)
# ---------------------------------------------------------------------------
def _fused_linear_kernel(x_ref, w_ref, b_ref, o_ref, acc_ref):
    k = pl.program_id(1)

    @pl.when(k == 0)
    def _init():
        # Bias folded into the accumulator init: acc starts at b (full-vreg,
        # lane/sublane-dense f32 block -> plain VPU copy, no sublane broadcast).
        acc_ref[...] = b_ref[...]

    acc_ref[...] += jnp.dot(x_ref[...], w_ref[...],
                            preferred_element_type=jnp.float32)

    @pl.when(k == pl.num_programs(1) - 1)
    def _finalize():
        o_ref[...] = acc_ref[...].astype(o_ref.dtype)


# ---------------------------------------------------------------------------
# One-time parameter preparation (NOT in the per-forward path).
# ---------------------------------------------------------------------------
def prepare_params(w_cat, b_cat):
    """Pad + cast the concatenated head parameters once.

    Args:
      w_cat: (D, N) f32 -- per-head PyTorch weights (n_i, D) transposed and
             concatenated along the output axis.
      b_cat: (N,)  f32 -- concatenated biases.
    Returns:
      w_p: (Dp, Np) bf16, zero-padded.
      b_p: (1, Np)  f32, zero-padded.
    """
    D, N = w_cat.shape
    Dp, _ = _pad_and_tile(D, _TK_MAX)
    Np, _ = _pad_and_tile(N, _TN_MAX)
    w_p = jnp.pad(w_cat.astype(jnp.bfloat16), ((0, Dp - D), (0, Np - N)))
    b_p = jnp.pad(b_cat.astype(jnp.float32), (0, Np - N)).reshape(1, Np)
    return w_p, b_p


# ---------------------------------------------------------------------------
# Jitted forward: returns one lane-dense fused logits slab (Bp, Np) f32.
# ---------------------------------------------------------------------------
@jax.jit
def multi_discrete_head_forward_fused(x, w_p, b_p):
    B, D = x.shape
    Dp, Np = w_p.shape
    Bp = _round_up(max(B, _BATCH_TILE), _BATCH_TILE)

    _, tk = _pad_and_tile(Dp, _TK_MAX)
    _, tn = _pad_and_tile(Np, _TN_MAX)
    grid = (Np // tn, Dp // tk)          # N first (parallel), K (reduction) last

    # Activation padding: single pad op, cast to bf16 for the MXU.
    x_p = jnp.pad(x.astype(jnp.bfloat16), ((0, Bp - B), (0, Dp - D)))
    # Tiny lane/sublane-dense bias slab (Bp is the small padded batch).
    b_bc = jnp.broadcast_to(b_p, (Bp, Np))

    flops = 2 * Bp * Dp * Np
    bytes_accessed = (Bp * Dp * 2) + (Dp * Np * 2) + (Bp * Np * 4) + (Bp * Np * 4)

    out_p = pl.pallas_call(
        _fused_linear_kernel,
        out_shape=jax.ShapeDtypeStruct((Bp, Np), jnp.float32),
        grid_spec=pltpu.PrefetchScalarGridSpec(
            num_scalar_prefetch=0,
            grid=grid,
            in_specs=[
                pl.BlockSpec((Bp, tk), lambda n, k: (0, k)),   # x tile
                pl.BlockSpec((tk, tn), lambda n, k: (k, n)),   # W tile
                pl.BlockSpec((Bp, tn), lambda n, k: (0, n)),   # bias tile
            ],
            out_specs=pl.BlockSpec((Bp, tn), lambda n, k: (0, n)),
            scratch_shapes=[pltpu.VMEM((Bp, tn), jnp.float32)],
        ),
        compiler_params=pltpu.CompilerParams(
            dimension_semantics=("parallel", "arbitrary")),
        cost_estimate=pl.CostEstimate(
            flops=flops, transcendentals=0, bytes_accessed=bytes_accessed),
    )(x_p, w_p, b_bc)
    return out_p


# ---------------------------------------------------------------------------
# Consumer-side glue: split the fused slab into per-head logits (outside jit).
# ---------------------------------------------------------------------------
def split_logits(fused_padded, batch, nvec):
    logits = []
    off = 0
    for n in nvec:
        logits.append(fused_padded[:batch, off:off + n])
        off += n
    return logits


def init_params(key, input_dim, nvec):
    """Deterministic nn.Linear-style init: U(-1/sqrt(D), 1/sqrt(D))."""
    bound = 1.0 / np.sqrt(input_dim)
    ws, bs = [], []
    for n in nvec:
        key, kw, kb = jax.random.split(key, 3)
        # PyTorch stores weight as (n, D); we keep the transposed (D, n) layout.
        w = jax.random.uniform(kw, (input_dim, n), jnp.float32, -bound, bound)
        b = jax.random.uniform(kb, (n,), jnp.float32, -bound, bound)
        ws.append(w)
        bs.append(b)
    w_cat = jnp.concatenate(ws, axis=1)
    b_cat = jnp.concatenate(bs, axis=0)
    return w_cat, b_cat


if __name__ == "__main__":
    batch = 2
    input_dim = 32
    nvec = (3, 5, 4)  # MultiDiscrete([3, 5, 4])

    key = jax.random.PRNGKey(0)
    key, kx = jax.random.split(key)
    x = jax.random.normal(kx, (batch, input_dim), jnp.float32)

    w_cat, b_cat = init_params(key, input_dim, nvec)

    # One-time parameter prep (padding + bf16 cast) -- hoisted out of forward.
    w_p, b_p = prepare_params(w_cat, b_cat)

    fused = multi_discrete_head_forward_fused(x, w_p, b_p)
    fused = jax.block_until_ready(fused)

    logits = split_logits(fused, batch, nvec)

    # Reference with matched bf16 operand / f32 accumulation semantics.
    ref_cat = (jnp.dot(x.astype(jnp.bfloat16), w_cat.astype(jnp.bfloat16),
                       preferred_element_type=jnp.float32)
               + b_cat.astype(jnp.float32))
    # Loose sanity check against full-f32 math as well.
    ref_cat_f32 = x @ w_cat + b_cat

    off = 0
    for n, l in zip(nvec, logits):
        ref = ref_cat[:, off:off + n]
        ref_f32 = ref_cat_f32[:, off:off + n]
        off += n
        assert l.shape == (batch, n), (l.shape, (batch, n))
        np.testing.assert_allclose(np.asarray(l), np.asarray(ref),
                                   rtol=1e-5, atol=1e-5)
        np.testing.assert_allclose(np.asarray(l), np.asarray(ref_f32),
                                   rtol=2e-2, atol=2e-2)

    # TODO(synk): probabilities/distribution/sample/simple/random (softmax,
    # Categorical sampling, argmax) are consumer-side ops, not part of this
    # kernel's forward().

    print("KERNEL_OK")
</pallas_src>

<mosaic_0001>
module attributes {stable_mosaic.version = 11 : i64} {
  func.func @_fused_linear_kernel(%arg0: i32, %arg1: i32, %arg2: memref<16x128xbf16, #tpu.memory_space<vmem>>, %arg3: memref<128x128xbf16, #tpu.memory_space<vmem>>, %arg4: memref<16x128xf32, #tpu.memory_space<vmem>>, %arg5: memref<16x128xf32, #tpu.memory_space<vmem>>, %arg6: memref<16x128xf32, #tpu.memory_space<vmem>>) attributes {dimension_semantics = [#tpu.dimension_semantics<parallel>, #tpu.dimension_semantics<arbitrary>], iteration_bounds = array<i64: 1, 1>, scalar_prefetch = 0 : i64, scratch_operands = 1 : i64, tpu.core_type = #tpu.core_type<tc>, window_params = [{transform_indices = @transform_0, window_bounds = array<i64: 16, 128>}, {transform_indices = @transform_1, window_bounds = array<i64: 128, 128>}, {transform_indices = @transform_2, window_bounds = array<i64: 16, 128>}, {transform_indices = @transform_3, window_bounds = array<i64: 16, 128>}]} {
    %c0_i32 = arith.constant 0 : i32
    %0 = arith.cmpi eq, %arg1, %c0_i32 : i32
    %1 = arith.extui %0 : i1 to i32
    %c0_i32_0 = arith.constant 0 : i32
    %2 = arith.cmpi ne, %1, %c0_i32_0 : i32
    scf.if %2 {
      %c0_10 = arith.constant 0 : index
      %c0_11 = arith.constant 0 : index
      %12 = vector.load %arg4[%c0_10, %c0_11] : memref<16x128xf32, #tpu.memory_space<vmem>>, vector<16x128xf32>
      %c0_12 = arith.constant 0 : index
      %c0_13 = arith.constant 0 : index
      %13 = vector.load %arg6[%c0_12, %c0_13] : memref<16x128xf32, #tpu.memory_space<vmem>>, vector<16x128xf32>
      tpu.vector_store %arg6[%c0_12, %c0_13], %12 {strides = array<i32>} : memref<16x128xf32, #tpu.memory_space<vmem>>, vector<16x128xf32>,
    } else {
    }
    %c0 = arith.constant 0 : index
    %c0_1 = arith.constant 0 : index
    %3 = vector.load %arg6[%c0, %c0_1] : memref<16x128xf32, #tpu.memory_space<vmem>>, vector<16x128xf32>
    %c0_2 = arith.constant 0 : index
    %c0_3 = arith.constant 0 : index
    %4 = vector.load %arg2[%c0_2, %c0_3] : memref<16x128xbf16, #tpu.memory_space<vmem>>, vector<16x128xbf16>
    %c0_4 = arith.constant 0 : index
    %c0_5 = arith.constant 0 : index
    %5 = vector.load %arg3[%c0_4, %c0_5] : memref<128x128xbf16, #tpu.memory_space<vmem>>, vector<128x128xbf16>
    %cst = arith.constant dense<0.000000e+00> : vector<16x128xf32>
    %6 = tpu.matmul %4, %5, %cst {dimension_numbers = #tpu.dot_dimension_numbers<[1], [0], [0], [1], [0, 0, 1, 1], [], []>} : vector<16x128xbf16>, vector<128x128xbf16>, vector<16x128xf32> -> vector<16x128xf32>
    %7 = arith.addf %3, %6 : vector<16x128xf32>
    %c0_6 = arith.constant 0 : index
    %c0_7 = arith.constant 0 : index
    %8 = vector.load %arg6[%c0_6, %c0_7] : memref<16x128xf32, #tpu.memory_space<vmem>>, vector<16x128xf32>
    tpu.vector_store %arg6[%c0_6, %c0_7], %7 {strides = array<i32>} : memref<16x128xf32, #tpu.memory_space<vmem>>, vector<16x128xf32>,
    %c0_i32_8 = arith.constant 0 : i32
    %9 = arith.cmpi eq, %arg1, %c0_i32_8 : i32
    %10 = arith.extui %9 : i1 to i32
    %c0_i32_9 = arith.constant 0 : i32
    %11 = arith.cmpi ne, %10, %c0_i32_9 : i32
    scf.if %11 {
      %c0_10 = arith.constant 0 : index
      %c0_11 = arith.constant 0 : index
      %12 = vector.load %arg6[%c0_10, %c0_11] : memref<16x128xf32, #tpu.memory_space<vmem>>, vector<16x128xf32>
      %c0_12 = arith.constant 0 : index
      %c0_13 = arith.constant 0 : index
      %13 = vector.load %arg5[%c0_12, %c0_13] : memref<16x128xf32, #tpu.memory_space<vmem>>, vector<16x128xf32>
      tpu.vector_store %arg5[%c0_12, %c0_13], %12 {strides = array<i32>} : memref<16x128xf32, #tpu.memory_space<vmem>>, vector<16x128xf32>,
    } else {
    }
    return
  }
  func.func @transform_0(%arg0: i32, %arg1: i32) -> (i32, i32) {
    %c0_i32 = arith.constant 0 : i32
    %c0_i32_0 = arith.constant 0 : i32
    return %c0_i32, %arg1 : i32, i32
  }
  func.func @transform_1(%arg0: i32, %arg1: i32) -> (i32, i32) {
    %c0_i32 = arith.constant 0 : i32
    return %arg1, %arg0 : i32, i32
  }
  func.func @transform_2(%arg0: i32, %arg1: i32) -> (i32, i32) {
    %c0_i32 = arith.constant 0 : i32
    %c0_i32_0 = arith.constant 0 : i32
    return %c0_i32, %arg0 : i32, i32
  }
  func.func @transform_3(%arg0: i32, %arg1: i32) -> (i32, i32) {
    %c0_i32 = arith.constant 0 : i32
    %c0_i32_0 = arith.constant 0 : i32
    return %c0_i32, %arg0 : i32, i32
  }
}

</mosaic_0001>

<llo_original>
// kernel: multi_discrete_head_forward_fused.1
$region0: #{multi_discrete_head_forward_fused.1}
  #allocation0 [shape = 'u32[]', space=smem, size = 0x4, offset = 0x4, fixed_abs, tag = 'smem constant byte address 0x4 - core index']
  #allocation1 [shape = 'u32[72,128]{1,0:T(1,128)}', space=vmem, size = 0x9000, scoped, tag = 'internal scratch']
  #allocation2 [shape = 'f32[16,128]{1,0:T(8,128)}', space=vmem, size = 0x2000, scoped, tag = 'scratch operand']
  %s0 = inlined_call_operand.vmem [shape: bf16[16,128], index: 0, kind: input, shape index: {}]
  %s1 = inlined_call_operand.hbm [shape: bf16[128,128], index: 1, kind: input, shape index: {}]
  %s2 = inlined_call_operand.vmem [shape: f32[16,128], index: 2, kind: input, shape index: {}]
  %s3 = inlined_call_operand.hbm [shape: f32[16,128], index: 3, kind: output, shape index: {}]
  %s4 = sld [smem:[#allocation0]]
  $region34: #{multi_discrete_head_forward_fused.1} parent=0
    _
  %s6 = ssub.s32 1, %s4
  %s7 = scalar_select 0, %s6, %s4
  $region1: #{multi_discrete_head_forward_fused.1} parent=0
    #allocation3 [shape = 'u8[32768]{0}', space=vmem, size = 0x8000, scoped, tag = 'input window, operand 1, single buffered']
    #allocation4 [shape = 's32[1]{0}', space=sflag, size = 0x4, scoped, tag = 'scoped memory for multi_discrete_head_forward_fused.1']
    #allocation5 [shape = 's32[1]{0}', space=sflag, size = 0x4, scoped, tag = 'scoped memory for multi_discrete_head_forward_fused.1']
    #allocation6 [shape = 'u8[8192]{0}', space=vmem, size = 0x2000, scoped, tag = 'output window, operand 0, single buffered']
    %8 = vsyncpa [#allocation4], 0
    %9 = vsyncpa [#allocation5], 0
    // Predicated region
    $region2: #{multi_discrete_head_forward_fused.1} parent=1 // pred_check
      _
    $region3: #{multi_discrete_head_forward_fused.1} parent=1 // pred_check_branch
      %11 = sbr.rel (0) target = $region5
    $region4: #{multi_discrete_head_forward_fused.1} parent=1 // pred_region
      _
    $region5: #{multi_discrete_head_forward_fused.1} parent=1 // pred_fallthru
      _
    // Predicated region
    $region6: #{multi_discrete_head_forward_fused.1} parent=1 // pred_check
      _
    $region7: #{multi_discrete_head_forward_fused.1} parent=1 // pred_check_branch
      %13 = sbr.rel (0) target = $region9
    $region8: #{multi_discrete_head_forward_fused.1} parent=1 // pred_region
      %15 = vsyncadd [#allocation4], 0
      %s16 = sshll.u32 %s1, 4
      %s17 = int_to_ptr.hbm [resolvable:$true] %s16
      %s18 = sshll.u32 [#allocation3], 4
      %s19 = int_to_ptr.vmem [resolvable:$true] %s18
      %24 = dma.hbm_to_vmem [thread:$0]  %s17, 1024, %s19, [#allocation4], 64, 64, 4
    $region9: #{multi_discrete_head_forward_fused.1} parent=1 // pred_fallthru
      _
    // Predicated region
    $region10: #{multi_discrete_head_forward_fused.1} parent=1 // pred_check
      _
    $region11: #{multi_discrete_head_forward_fused.1} parent=1 // pred_check_branch
      %26 = sbr.rel (0) target = $region13
    $region12: #{multi_discrete_head_forward_fused.1} parent=1 // pred_region
      _
    $region13: #{multi_discrete_head_forward_fused.1} parent=1 // pred_fallthru
      _
    // Predicated region
    $region14: #{multi_discrete_head_forward_fused.1} parent=1 // pred_check
      _
    $region15: #{multi_discrete_head_forward_fused.1} parent=1 // pred_check_branch
      %28 = sbr.rel (0) target = $region17
    $region16: #{multi_discrete_head_forward_fused.1} parent=1 // pred_region
      %30 = dma.done [#allocation4], 1024
    $region17: #{multi_discrete_head_forward_fused.1} parent=1 // pred_fallthru
      _
    %p31 = scmp.eq.s32.totalorder 0, 0
    // Predicated region
    $region18: #{multi_discrete_head_forward_fused.1} parent=1 // pred_check
      %p32 = pneg %p31
    $region19: #{multi_discrete_head_forward_fused.1} parent=1 // pred_check_branch
      %34 = sbr.rel (%p32) target = $region21
    $region20: #{multi_discrete_head_forward_fused.1} parent=1 // pred_region
      %v35 = vld [vmem:[%s2] sm:$0xff]
      %v36 = vld [vmem:[%s2 + $0x8] sm:$0xff]
      %37 = vst [vmem:[#allocation2] sm:$0xff] %v35
      %38 = vst [vmem:[#allocation2 + $0x8] sm:$0xff] %v36
    $region21: #{multi_discrete_head_forward_fused.1} parent=1 // pred_fallthru
      _
    %v39 = vld [vmem:[#allocation2] sm:$0xff]
    %v40 = vld [vmem:[#allocation2 + $0x8] sm:$0xff]
    %v41 = vld [vmem:[%s0] sm:$0xf]
    %v42 = vld [vmem:[%s0 + $0x4] sm:$0xf]
    %v43 = vld [vmem:[#allocation3] sm:$0xf]
    %v44 = vld [vmem:[#allocation3 + $0x4] sm:$0xf]
    %v45 = vld [vmem:[#allocation3 + $0x8] sm:$0xf]
    %v46 = vld [vmem:[#allocation3 + $0xc] sm:$0xf]
    %v47 = vld [vmem:[#allocation3 + $0x10] sm:$0xf]
    %v48 = vld [vmem:[#allocation3 + $0x14] sm:$0xf]
    %v49 = vld [vmem:[#allocation3 + $0x18] sm:$0xf]
    %v50 = vld [vmem:[#allocation3 + $0x1c] sm:$0xf]
    %v51 = vld [vmem:[#allocation3 + $0x20] sm:$0xf]
    %v52 = vld [vmem:[#allocation3 + $0x24] sm:$0xf]
    %v53 = vld [vmem:[#allocation3 + $0x28] sm:$0xf]
    %v54 = vld [vmem:[#allocation3 + $0x2c] sm:$0xf]
    %v55 = vld [vmem:[#allocation3 + $0x30] sm:$0xf]
    %v56 = vld [vmem:[#allocation3 + $0x34] sm:$0xf]
    %v57 = vld [vmem:[#allocation3 + $0x38] sm:$0xf]
    %v58 = vld [vmem:[#allocation3 + $0x3c] sm:$0xf]
    %v61 = vunpack.c.l.b16 %v41
    %v62 = vunpack.c.l.b16 %v42
    %v63 = vpack.c.b16 %v62, %v61
    %v81 = vunpack.c.l.b16 %v43
    %v82 = vunpack.c.l.b16 %v44
    %v83 = vunpack.c.l.b16 %v45
    %v84 = vunpack.c.l.b16 %v46
    %v85 = vunpack.c.l.b16 %v47
    %v86 = vunpack.c.l.b16 %v48
    %v87 = vunpack.c.l.b16 %v49
    %v88 = vunpack.c.l.b16 %v50
    %v89 = vunpack.c.l.b16 %v51
    %v90 = vunpack.c.l.b16 %v52
    %v91 = vunpack.c.l.b16 %v53
    %v92 = vunpack.c.l.b16 %v54
    %v93 = vunpack.c.l.b16 %v55
    %v94 = vunpack.c.l.b16 %v56
    %v95 = vunpack.c.l.b16 %v57
    %v96 = vunpack.c.l.b16 %v58
    %v97 = vpack.c.b16 %v82, %v81
    %v98 = vpack.c.b16 %v84, %v83
    %v99 = vpack.c.b16 %v86, %v85
    %v100 = vpack.c.b16 %v88, %v87
    %v101 = vpack.c.b16 %v90, %v89
    %v102 = vpack.c.b16 %v92, %v91
    %v103 = vpack.c.b16 %v94, %v93
    %v104 = vpack.c.b16 %v96, %v95
    %113 = vmatpush.bf16.msra.mxu0 %v104
    %114 = vmatpush.bf16.msra.mxu0 %v103
    %115 = vmatpush.bf16.msra.mxu0 %v102
    %116 = vmatpush.bf16.msra.mxu0 %v101
    %117 = vmatpush.bf16.msra.mxu0 %v100
    %118 = vmatpush.bf16.msra.mxu0 %v99
    %119 = vmatpush.bf16.msra.mxu0 %v98
    %120 = vmatpush.bf16.msra.mxu0 %v97
    %121 = vmatmul.bf16.gmra.mxu0 %v63
    %v122 = vpop.f32.mrf.mxu0
    %v123 = vadd.f32 0.0, %v122
    %v124 = vpop.f32.mrf.mxu0
    %v125 = vadd.f32 0.0, %v124
    %126 = vdwg.mxu0
    %v127 = vadd.f32 %v39, %v123
    %v128 = vadd.f32 %v40, %v125
    %129 = vst [vmem:[#allocation2] sm:$0xff] %v127
    %130 = vst [vmem:[#allocation2 + $0x8] sm:$0xff] %v128
    // Predicated region
    $region22: #{multi_discrete_head_forward_fused.1} parent=1 // pred_check
      %p131 = pneg %p31
    $region23: #{multi_discrete_head_forward_fused.1} parent=1 // pred_check_branch
      %133 = sbr.rel (%p131) target = $region25
    $region24: #{multi_discrete_head_forward_fused.1} parent=1 // pred_region
      %v134 = vld [vmem:[#allocation2] sm:$0xff]
      %v135 = vld [vmem:[#allocation2 + $0x8] sm:$0xff]
      %136 = vst [vmem:[#allocation6] sm:$0xff] %v134
      %137 = vst [vmem:[#allocation6 + $0x8] sm:$0xff] %v135
    $region25: #{multi_discrete_head_forward_fused.1} parent=1 // pred_fallthru
      _
    // Predicated region
    $region26: #{multi_discrete_head_forward_fused.1} parent=1 // pred_check
      _
    $region27: #{multi_discrete_head_forward_fused.1} parent=1 // pred_check_branch
      %139 = sbr.rel (0) target = $region29
    $region28: #{multi_discrete_head_forward_fused.1} parent=1 // pred_region
      %141 = vsyncadd [#allocation5], 0
      %s142 = sshll.u32 [#allocation6], 4
      %s143 = int_to_ptr.vmem [resolvable:$true] %s142
      %s144 = sshll.u32 %s3, 4
      %s145 = int_to_ptr.hbm [resolvable:$true] %s144
      %150 = dma.vmem_to_hbm [thread:$0]  %s143, 256, %s145, [#allocation5], 128, 128, 8
    $region29: #{multi_discrete_head_forward_fused.1} parent=1 // pred_fallthru
      _
    // Predicated region
    $region30: #{multi_discrete_head_forward_fused.1} parent=1 // pred_check
      _
    $region31: #{multi_discrete_head_forward_fused.1} parent=1 // pred_check_branch
      %152 = sbr.rel (0) target = $region33
    $region32: #{multi_discrete_head_forward_fused.1} parent=1 // pred_region
      %154 = dma.done [#allocation5], 256
    $region33: #{multi_discrete_head_forward_fused.1} parent=1 // pred_fallthru
      _
    %155 = vsyncpa [#allocation4], 1
    %156 = vsyncpa [#allocation5], 1

</llo_original>
